<compile_context>
chip_gen: v7x
topology: tpu7x:2x2x1
jax: 0.10.0
libtpu: 0.0.40
codegen_flags: <defaults>
</compile_context>

<pallas_src>
import jax
import jax.numpy as jnp
from jax import lax
from jax.experimental import pallas as pl
from jax.experimental.pallas import tpu as pltpu


def ynet_kernel(x_ref, w1_ref, b1_ref, w2_ref, b2_ref, w3_ref, b3_ref, o_ref):
    wdt = w1_ref.dtype                  # f32, or bf16 if the wrapper pre-cast
    x = x_ref[...]                      # (tm, dim) f32 row tile

    # Layer 1: contract the shared `dim` axis: (H, dim) . (tm, dim) -> (H, tm).
    # MXU with f32 accumulation; bias add / tanh stay f32 (v5e VPU/EUP: no bf16).
    h1 = lax.dot_general(
        w1_ref[...], x.astype(wdt),
        dimension_numbers=(((1,), (1,)), ((), ())),
        preferred_element_type=jnp.float32) + b1_ref[...]
    h1 = jnp.tanh(h1)

    # Layer 2: (H, H) @ (H, tm) -> (H, tm).
    h2 = jnp.dot(w2_ref[...], h1.astype(wdt),
                 preferred_element_type=jnp.float32) + b2_ref[...]
    h2 = jnp.tanh(h2)
    # TODO(synk): on v6e/v7x (bf16 VPU/EUP) the bias-add/tanh could also run in
    # bf16 when weights are bf16; kept f32 for v5e compatibility + accuracy.

    # Layer 3 (out_features == 1): VPU multiply + cross-sublane (XLU) reduce
    # instead of an M=1 MXU matmul; b3 is a scalar read from SMEM.
    out = jnp.sum(h2 * w3_ref[...], axis=0, keepdims=True) + b3_ref[0]   # (1, tm)
    o_ref[...] = out.astype(o_ref.dtype)


def _pick_tm(N, tm, device_kind):
    """Batch-tile selection: one big step on single-TC chips, >=2 even 128-wide
    blocks on v7x, always a full-extent single block when the batch fits."""
    n128 = max(128, pl.cdiv(N, 128) * 128)
    if tm is None:
        if "v7" in device_kind and n128 > 128:
            # v7x has 2 TensorCores: give the ("parallel",) grid >=2 even blocks.
            tm = pl.cdiv(pl.cdiv(n128, 128), 2) * 128
        else:
            # v5e/v6e: a single TC, so one big step minimizes pipeline overhead.
            tm = n128
        tm = min(tm, 1024)
    else:
        tm = min(max(128, (tm // 128) * 128), n128)
    if tm >= N:
        return N, 1          # single full-extent block: no implicit padding
    return tm, pl.cdiv(N, tm)


def ynet_forward(x, params, *, tm=None, use_bf16=False, weight_buffers=None):
    """x: [N, dim] float32.  params in PyTorch layout:
       W1 (H, dim), b1 (H,), W2 (H, H), b2 (H,), W3 (1, H), b3 (1,).

    weight_buffers: optional pipeline buffer count for the resident weight
    blocks (e.g. 1 on v7x with large H to halve weight VMEM); default leaves
    Pallas' standard double-buffering in place."""
    N, dim = x.shape
    H = params["W1"].shape[0]

    device_kind = jax.devices()[0].device_kind.lower()
    tm, n_blocks = _pick_tm(N, tm, device_kind)

    x = x.astype(jnp.float32)
    wdtype = jnp.bfloat16 if use_bf16 else jnp.float32
    # Pre-cast resident matmul weights once in the wrapper (removes a per-step
    # VPU cast and halves their DMA bytes); biases / w3 stay f32 (VPU-side only).
    w1 = params["W1"].astype(wdtype)                    # (H, dim)
    w2 = params["W2"].astype(wdtype)                    # (H, H)
    w3 = params["W3"].reshape(H, 1).astype(jnp.float32)
    b1 = params["b1"].reshape(H, 1).astype(jnp.float32)
    b2 = params["b2"].reshape(H, 1).astype(jnp.float32)
    b3 = params["b3"].reshape(1).astype(jnp.float32)    # scalar -> SMEM

    resident = lambda i: (0, 0)   # weights/biases: constant block, DMA'd once

    def rspec(shape):
        if weight_buffers is None:
            return pl.BlockSpec(shape, resident)
        return pl.BlockSpec(shape, resident, pipeline_mode=pl.Buffered(weight_buffers))

    # VMEM budget derived from the actual footprint, capped for v7x's 64 MiB.
    wbytes = jnp.dtype(wdtype).itemsize
    weight_bytes = (H * dim + H * H) * wbytes + 3 * H * 4
    wbuf = 2 if weight_buffers is None else max(1, weight_buffers)
    io_bytes = 2 * tm * dim * 4 + 2 * tm * 4       # double-buffered x / out tiles
    act_bytes = 4 * H * tm * 4                     # h1/h2 f32 + temp headroom
    footprint = wbuf * weight_bytes + io_bytes + act_bytes
    vmem_limit = int(min(48 * 2**20, max(16 * 2**20, 4 * footprint)))

    flops = 2 * N * (dim * H + H * H + H)
    transcendentals = 2 * N * H
    bytes_accessed = (4 * N * dim + wbytes * (H * dim + H * H)
                      + 4 * (3 * H + 1) + 4 * N)

    out = pl.pallas_call(
        ynet_kernel,
        out_shape=jax.ShapeDtypeStruct((1, N), jnp.float32),
        grid_spec=pltpu.PrefetchScalarGridSpec(
            num_scalar_prefetch=0,
            grid=(n_blocks,),
            in_specs=[
                pl.BlockSpec((tm, dim), lambda i: (i, 0)),          # x row tile
                rspec((H, dim)),                                    # W1
                rspec((H, 1)),                                      # b1
                rspec((H, H)),                                      # W2
                rspec((H, 1)),                                      # b2
                rspec((H, 1)),                                      # w3
                pl.BlockSpec(memory_space=pltpu.MemorySpace.SMEM),  # b3 scalar
            ],
            out_specs=pl.BlockSpec((1, tm), lambda i: (0, i)),      # lane-dense
        ),
        compiler_params=pltpu.CompilerParams(
            dimension_semantics=("parallel",),
            vmem_limit_bytes=vmem_limit,
        ),
        cost_estimate=pl.CostEstimate(
            flops=flops,
            transcendentals=transcendentals,
            bytes_accessed=bytes_accessed,
        ),
    )(x, w1, b1, w2, b2, w3, b3)

    return out[0][:, None]   # back to (N, 1), matching nn.Linear output


def init_params(key, dim, num_neurons):
    """nn.Linear-style init U(-1/sqrt(fan_in), 1/sqrt(fan_in)), PyTorch layout."""
    ks = jax.random.split(key, 6)

    def lin(kw, kb, fan_in, fan_out):
        bound = 1.0 / jnp.sqrt(float(fan_in))
        W = jax.random.uniform(kw, (fan_out, fan_in), jnp.float32, -bound, bound)
        b = jax.random.uniform(kb, (fan_out,), jnp.float32, -bound, bound)
        return W, b

    W1, b1 = lin(ks[0], ks[1], dim, num_neurons)
    W2, b2 = lin(ks[2], ks[3], num_neurons, num_neurons)
    W3, b3 = lin(ks[4], ks[5], num_neurons, 1)
    return {"W1": W1, "b1": b1, "W2": W2, "b2": b2, "W3": W3, "b3": b3}


def ynet_reference(x, p):
    h1 = jnp.tanh(x @ p["W1"].T + p["b1"][None, :])
    h2 = jnp.tanh(h1 @ p["W2"].T + p["b2"][None, :])
    return h2 @ p["W3"].T + p["b3"][None, :]


if __name__ == "__main__":
    # pde['dim'] = 4, sim['num_neurons'] = 32; N = 1000 exercises both the
    # single-block (v5e/v6e) and multi-block (v7x / explicit tm) tilings plus a
    # ragged tail handled by Pallas partial edge blocks.
    dim, num_neurons, batch = 4, 32, 1000
    key = jax.random.PRNGKey(0)
    kx, kp = jax.random.split(key)
    x = jax.random.normal(kx, (batch, dim), jnp.float32)
    params = init_params(kp, dim, num_neurons)

    ref = ynet_reference(x, params)

    # f32 MXU path with auto tile selection: tight match vs the reference.
    out_f32 = jax.block_until_ready(ynet_forward(x, params))
    assert out_f32.shape == (batch, 1)
    assert jnp.allclose(out_f32, ref, atol=1e-5, rtol=1e-5), "f32 mismatch vs reference"

    # bf16 matmul-operand path (weights pre-cast in the wrapper, f32 accumulation).
    out_bf16 = jax.block_until_ready(ynet_forward(x, params, use_bf16=True))
    assert out_bf16.shape == (batch, 1)
    assert jnp.allclose(out_bf16, ref, atol=5e-2, rtol=5e-2), "bf16 mismatch vs reference"

    # Explicit multi-block tiling path (tm=256 -> 4 grid steps, partial tail block).
    out_tiled = jax.block_until_ready(ynet_forward(x, params, tm=256))
    assert jnp.allclose(out_tiled, ref, atol=1e-5, rtol=1e-5), "tiled mismatch vs reference"

    print("KERNEL_OK")
</pallas_src>

<mosaic_0001>
module attributes {stable_mosaic.version = 11 : i64} {
  func.func @ynet_kernel(%arg0: i32, %arg1: memref<1000x4xf32, #tpu.memory_space<vmem>>, %arg2: memref<32x4xf32, #tpu.memory_space<vmem>>, %arg3: memref<32x1xf32, #tpu.memory_space<vmem>>, %arg4: memref<32x32xf32, #tpu.memory_space<vmem>>, %arg5: memref<32x1xf32, #tpu.memory_space<vmem>>, %arg6: memref<32x1xf32, #tpu.memory_space<vmem>>, %arg7: memref<1xf32, #tpu.memory_space<smem>>, %arg8: memref<1x1000xf32, #tpu.memory_space<vmem>>) attributes {dimension_semantics = [#tpu.dimension_semantics<parallel>], iteration_bounds = array<i64: 1>, scalar_prefetch = 0 : i64, scratch_operands = 0 : i64, tpu.core_type = #tpu.core_type<tc>, window_params = [{transform_indices = @transform_0, window_bounds = array<i64: 1000, 4>}, {pipeline_mode = #tpu.pipeline_mode<synchronous>, transform_indices = @transform_1, window_bounds = array<i64: 32, 4>}, {pipeline_mode = #tpu.pipeline_mode<synchronous>, transform_indices = @transform_2, window_bounds = array<i64: 32, 1>}, {pipeline_mode = #tpu.pipeline_mode<synchronous>, transform_indices = @transform_3, window_bounds = array<i64: 32, 32>}, {pipeline_mode = #tpu.pipeline_mode<synchronous>, transform_indices = @transform_4, window_bounds = array<i64: 32, 1>}, {pipeline_mode = #tpu.pipeline_mode<synchronous>, transform_indices = @transform_5, window_bounds = array<i64: 32, 1>}, {transform_indices = @transform_6, window_bounds = array<i64: 1>}, {transform_indices = @transform_7, window_bounds = array<i64: 1, 1000>}]} {
    %c0 = arith.constant 0 : index
    %c0_0 = arith.constant 0 : index
    %0 = vector.load %arg1[%c0, %c0_0] : memref<1000x4xf32, #tpu.memory_space<vmem>>, vector<1000x4xf32>
    %c0_1 = arith.constant 0 : index
    %c0_2 = arith.constant 0 : index
    %1 = vector.load %arg2[%c0_1, %c0_2] : memref<32x4xf32, #tpu.memory_space<vmem>>, vector<32x4xf32>
    %cst = arith.constant dense<0.000000e+00> : vector<32x1000xf32>
    %2 = tpu.matmul %1, %0, %cst {dimension_numbers = #tpu.dot_dimension_numbers<[1], [1], [0], [0], [0, 0, 1, 0], [], []>} : vector<32x4xf32>, vector<1000x4xf32>, vector<32x1000xf32> -> vector<32x1000xf32>
    %c0_3 = arith.constant 0 : index
    %c0_4 = arith.constant 0 : index
    %3 = vector.load %arg3[%c0_3, %c0_4] : memref<32x1xf32, #tpu.memory_space<vmem>>, vector<32x1xf32>
    %4 = vector.broadcast %3 : vector<32x1xf32> to vector<32x1000xf32>
    %5 = arith.addf %2, %4 : vector<32x1000xf32>
    %6 = math.tanh %5 : vector<32x1000xf32>
    %c0_5 = arith.constant 0 : index
    %c0_6 = arith.constant 0 : index
    %7 = vector.load %arg4[%c0_5, %c0_6] : memref<32x32xf32, #tpu.memory_space<vmem>>, vector<32x32xf32>
    %cst_7 = arith.constant dense<0.000000e+00> : vector<32x1000xf32>
    %8 = tpu.matmul %7, %6, %cst_7 {dimension_numbers = #tpu.dot_dimension_numbers<[1], [0], [0], [1], [0, 0, 1, 1], [], []>} : vector<32x32xf32>, vector<32x1000xf32>, vector<32x1000xf32> -> vector<32x1000xf32>
    %c0_8 = arith.constant 0 : index
    %c0_9 = arith.constant 0 : index
    %9 = vector.load %arg5[%c0_8, %c0_9] : memref<32x1xf32, #tpu.memory_space<vmem>>, vector<32x1xf32>
    %10 = vector.broadcast %9 : vector<32x1xf32> to vector<32x1000xf32>
    %11 = arith.addf %8, %10 : vector<32x1000xf32>
    %12 = math.tanh %11 : vector<32x1000xf32>
    %c0_10 = arith.constant 0 : index
    %c0_11 = arith.constant 0 : index
    %13 = vector.load %arg6[%c0_10, %c0_11] : memref<32x1xf32, #tpu.memory_space<vmem>>, vector<32x1xf32>
    %14 = vector.broadcast %13 : vector<32x1xf32> to vector<32x1000xf32>
    %15 = arith.mulf %12, %14 : vector<32x1000xf32>
    %cst_12 = arith.constant dense<0.000000e+00> : vector<1000xf32>
    %16 = vector.multi_reduction <add>, %15, %cst_12 [0] : vector<32x1000xf32> to vector<1000xf32>
    %17 = vector.shape_cast %16 : vector<1000xf32> to vector<1x1000xf32>
    %c0_13 = arith.constant 0 : index
    %18 = memref.load %arg7[%c0_13] : memref<1xf32, #tpu.memory_space<smem>>
    %19 = vector.broadcast %18 : f32 to vector<1x1000xf32>
    %20 = arith.addf %17, %19 : vector<1x1000xf32>
    %c0_14 = arith.constant 0 : index
    %c0_15 = arith.constant 0 : index
    %21 = vector.load %arg8[%c0_14, %c0_15] : memref<1x1000xf32, #tpu.memory_space<vmem>>, vector<1x1000xf32>
    tpu.vector_store %arg8[%c0_14, %c0_15], %20 {strides = array<i32>} : memref<1x1000xf32, #tpu.memory_space<vmem>>, vector<1x1000xf32>,
    return
  }
  func.func @transform_0(%arg0: i32) -> (i32, i32) {
    %c0_i32 = arith.constant 0 : i32
    %c0_i32_0 = arith.constant 0 : i32
    return %arg0, %c0_i32 : i32, i32
  }
  func.func @transform_1(%arg0: i32) -> (i32, i32) {
    %c0_i32 = arith.constant 0 : i32
    %c0_i32_0 = arith.constant 0 : i32
    %c0_i32_1 = arith.constant 0 : i32
    return %c0_i32, %c0_i32_0 : i32, i32
  }
  func.func @transform_2(%arg0: i32) -> (i32, i32) {
    %c0_i32 = arith.constant 0 : i32
    %c0_i32_0 = arith.constant 0 : i32
    %c0_i32_1 = arith.constant 0 : i32
    return %c0_i32, %c0_i32_0 : i32, i32
  }
  func.func @transform_3(%arg0: i32) -> (i32, i32) {
    %c0_i32 = arith.constant 0 : i32
    %c0_i32_0 = arith.constant 0 : i32
    %c0_i32_1 = arith.constant 0 : i32
    return %c0_i32, %c0_i32_0 : i32, i32
  }
  func.func @transform_4(%arg0: i32) -> (i32, i32) {
    %c0_i32 = arith.constant 0 : i32
    %c0_i32_0 = arith.constant 0 : i32
    %c0_i32_1 = arith.constant 0 : i32
    return %c0_i32, %c0_i32_0 : i32, i32
  }
  func.func @transform_5(%arg0: i32) -> (i32, i32) {
    %c0_i32 = arith.constant 0 : i32
    %c0_i32_0 = arith.constant 0 : i32
    %c0_i32_1 = arith.constant 0 : i32
    return %c0_i32, %c0_i32_0 : i32, i32
  }
  func.func @transform_6(%arg0: i32) -> i32 {
    %c0_i32 = arith.constant 0 : i32
    %c0_i32_0 = arith.constant 0 : i32
    return %c0_i32 : i32
  }
  func.func @transform_7(%arg0: i32) -> (i32, i32) {
    %c0_i32 = arith.constant 0 : i32
    %c0_i32_0 = arith.constant 0 : i32
    return %c0_i32, %arg0 : i32, i32
  }
}

</mosaic_0001>

<llo_original>
// kernel: tpu_custom_call.1
$region0: #{tpu_custom_call.1}
  #allocation0 [shape = 'u32[]', space=smem, size = 0x4, offset = 0x4, fixed_abs, tag = 'smem constant byte address 0x4 - core index']
  #allocation1 [shape = 'u32[144,128]{1,0:T(1,128)}', space=vmem, size = 0x12000, scoped, tag = 'internal scratch']
  #allocation2 [shape = 'f32[1]{0:T(128)S(6)}', space=smem, size = 0x200, scoped, tag = 'scoped memory for tpu_custom_call.1']
  %s0 = inlined_call_operand.vmem [shape: f32[1000,4], index: 0, kind: input, shape index: {}]
  %s1 = inlined_call_operand.vmem [shape: f32[32,4], index: 1, kind: input, shape index: {}]
  %s2 = inlined_call_operand.vmem [shape: f32[32,1], index: 2, kind: input, shape index: {}]
  %s3 = inlined_call_operand.vmem [shape: f32[32,32], index: 3, kind: input, shape index: {}]
  %s4 = inlined_call_operand.vmem [shape: f32[32,1], index: 4, kind: input, shape index: {}]
  %s5 = inlined_call_operand.vmem [shape: f32[32,1], index: 5, kind: input, shape index: {}]
  %s6 = inlined_call_operand.<no memory space> [shape: f32[1], index: 6, kind: input, shape index: {}]
  %s7 = inlined_call_operand.hbm [shape: f32[1,1000], index: 7, kind: output, shape index: {}]
  %s8 = sld [smem:[#allocation0]]
  $region38: #{tpu_custom_call.1} parent=0
    _
  %s10 = ssub.s32 1, %s8
  %s11 = scalar_select 0, %s10, %s8
  %12 = sst [smem:[#allocation2]] %s6
  $region1: #{tpu_custom_call.1} parent=0
    #allocation3 [shape = 'u8[4096]{0}', space=vmem, size = 0x1000, scoped, tag = 'output window, operand 0, single buffered']
    #allocation4 [shape = 's32[1]{0}', space=sflag, size = 0x4, scoped, tag = 'scoped memory for tpu_custom_call.1']
    %13 = vsyncpa [#allocation4], 0
    // Predicated region
    $region2: #{tpu_custom_call.1} parent=1 // pred_check
      _
    $region3: #{tpu_custom_call.1} parent=1 // pred_check_branch
      %15 = sbr.rel (0) target = $region5
    $region4: #{tpu_custom_call.1} parent=1 // pred_region
      _
    $region5: #{tpu_custom_call.1} parent=1 // pred_fallthru
      _
    // Predicated region
    $region6: #{tpu_custom_call.1} parent=1 // pred_check
      _
    $region7: #{tpu_custom_call.1} parent=1 // pred_check_branch
      %17 = sbr.rel (0) target = $region9
    $region8: #{tpu_custom_call.1} parent=1 // pred_region
      _
    $region9: #{tpu_custom_call.1} parent=1 // pred_fallthru
      _
    // Predicated region
    $region10: #{tpu_custom_call.1} parent=1 // pred_check
      _
    $region11: #{tpu_custom_call.1} parent=1 // pred_check_branch
      %19 = sbr.rel (0) target = $region13
    $region12: #{tpu_custom_call.1} parent=1 // pred_region
      _
    $region13: #{tpu_custom_call.1} parent=1 // pred_fallthru
      _
    // Predicated region
    $region14: #{tpu_custom_call.1} parent=1 // pred_check
      _
    $region15: #{tpu_custom_call.1} parent=1 // pred_check_branch
      %21 = sbr.rel (0) target = $region17
    $region16: #{tpu_custom_call.1} parent=1 // pred_region
      _
    $region17: #{tpu_custom_call.1} parent=1 // pred_fallthru
      _
    // Predicated region
    $region18: #{tpu_custom_call.1} parent=1 // pred_check
      _
    $region19: #{tpu_custom_call.1} parent=1 // pred_check_branch
      %23 = sbr.rel (0) target = $region21
    $region20: #{tpu_custom_call.1} parent=1 // pred_region
      _
    $region21: #{tpu_custom_call.1} parent=1 // pred_fallthru
      _
    // Predicated region
    $region22: #{tpu_custom_call.1} parent=1 // pred_check
      _
    $region23: #{tpu_custom_call.1} parent=1 // pred_check_branch
      %25 = sbr.rel (0) target = $region25
    $region24: #{tpu_custom_call.1} parent=1 // pred_region
      _
    $region25: #{tpu_custom_call.1} parent=1 // pred_fallthru
      _
    // Predicated region
    $region26: #{tpu_custom_call.1} parent=1 // pred_check
      _
    $region27: #{tpu_custom_call.1} parent=1 // pred_check_branch
      %27 = sbr.rel (0) target = $region29
    $region28: #{tpu_custom_call.1} parent=1 // pred_region
      _
    $region29: #{tpu_custom_call.1} parent=1 // pred_fallthru
      _
    %v28 = vld [vmem:[%s0] sm:$0xff]
    %v29 = vld [vmem:[%s0 + $0x8] sm:$0xff]
    %v30 = vld [vmem:[%s0 + $0x10] sm:$0xff]
    %v31 = vld [vmem:[%s0 + $0x18] sm:$0xff]
    %v32 = vld [vmem:[%s0 + $0x20] sm:$0xff]
    %v33 = vld [vmem:[%s0 + $0x28] sm:$0xff]
    %v34 = vld [vmem:[%s0 + $0x30] sm:$0xff]
    %v35 = vld [vmem:[%s0 + $0x38] sm:$0xff]
    %v36 = vld [vmem:[%s0 + $0x40] sm:$0xff]
    %v37 = vld [vmem:[%s0 + $0x48] sm:$0xff]
    %v38 = vld [vmem:[%s0 + $0x50] sm:$0xff]
    %v39 = vld [vmem:[%s0 + $0x58] sm:$0xff]
    %v40 = vld [vmem:[%s0 + $0x60] sm:$0xff]
    %v41 = vld [vmem:[%s0 + $0x68] sm:$0xff]
    %v42 = vld [vmem:[%s0 + $0x70] sm:$0xff]
    %v43 = vld [vmem:[%s0 + $0x78] sm:$0xff]
    %v44 = vld [vmem:[%s0 + $0x80] sm:$0xff]
    %v45 = vld [vmem:[%s0 + $0x88] sm:$0xff]
    %v46 = vld [vmem:[%s0 + $0x90] sm:$0xff]
    %v47 = vld [vmem:[%s0 + $0x98] sm:$0xff]
    %v48 = vld [vmem:[%s0 + $0xa0] sm:$0xff]
    %v49 = vld [vmem:[%s0 + $0xa8] sm:$0xff]
    %v50 = vld [vmem:[%s0 + $0xb0] sm:$0xff]
    %v51 = vld [vmem:[%s0 + $0xb8] sm:$0xff]
    %v52 = vld [vmem:[%s0 + $0xc0] sm:$0xff]
    %v53 = vld [vmem:[%s0 + $0xc8] sm:$0xff]
    %v54 = vld [vmem:[%s0 + $0xd0] sm:$0xff]
    %v55 = vld [vmem:[%s0 + $0xd8] sm:$0xff]
    %v56 = vld [vmem:[%s0 + $0xe0] sm:$0xff]
    %v57 = vld [vmem:[%s0 + $0xe8] sm:$0xff]
    %v58 = vld [vmem:[%s0 + $0xf0] sm:$0xff]
    %v59 = vld [vmem:[%s0 + $0xf8] sm:$0xff]
    %v60 = vld [vmem:[%s0 + $0x100] sm:$0xff]
    %v61 = vld [vmem:[%s0 + $0x108] sm:$0xff]
    %v62 = vld [vmem:[%s0 + $0x110] sm:$0xff]
    %v63 = vld [vmem:[%s0 + $0x118] sm:$0xff]
    %v64 = vld [vmem:[%s0 + $0x120] sm:$0xff]
    %v65 = vld [vmem:[%s0 + $0x128] sm:$0xff]
    %v66 = vld [vmem:[%s0 + $0x130] sm:$0xff]
    %v67 = vld [vmem:[%s0 + $0x138] sm:$0xff]
    %v68 = vld [vmem:[%s0 + $0x140] sm:$0xff]
    %v69 = vld [vmem:[%s0 + $0x148] sm:$0xff]
    %v70 = vld [vmem:[%s0 + $0x150] sm:$0xff]
    %v71 = vld [vmem:[%s0 + $0x158] sm:$0xff]
    %v72 = vld [vmem:[%s0 + $0x160] sm:$0xff]
    %v73 = vld [vmem:[%s0 + $0x168] sm:$0xff]
    %v74 = vld [vmem:[%s0 + $0x170] sm:$0xff]
    %v75 = vld [vmem:[%s0 + $0x178] sm:$0xff]
    %v76 = vld [vmem:[%s0 + $0x180] sm:$0xff]
    %v77 = vld [vmem:[%s0 + $0x188] sm:$0xff]
    %v78 = vld [vmem:[%s0 + $0x190] sm:$0xff]
    %v79 = vld [vmem:[%s0 + $0x198] sm:$0xff]
    %v80 = vld [vmem:[%s0 + $0x1a0] sm:$0xff]
    %v81 = vld [vmem:[%s0 + $0x1a8] sm:$0xff]
    %v82 = vld [vmem:[%s0 + $0x1b0] sm:$0xff]
    %v83 = vld [vmem:[%s0 + $0x1b8] sm:$0xff]
    %v84 = vld [vmem:[%s0 + $0x1c0] sm:$0xff]
    %v85 = vld [vmem:[%s0 + $0x1c8] sm:$0xff]
    %v86 = vld [vmem:[%s0 + $0x1d0] sm:$0xff]
    %v87 = vld [vmem:[%s0 + $0x1d8] sm:$0xff]
    %v88 = vld [vmem:[%s0 + $0x1e0] sm:$0xff]
    %v89 = vld [vmem:[%s0 + $0x1e8] sm:$0xff]
    %v90 = vld [vmem:[%s0 + $0x1f0] sm:$0xff]
    %v91 = vld [vmem:[%s0 + $0x1f8] sm:$0xff]
    %v92 = vld [vmem:[%s0 + $0x200] sm:$0xff]
    %v93 = vld [vmem:[%s0 + $0x208] sm:$0xff]
    %v94 = vld [vmem:[%s0 + $0x210] sm:$0xff]
    %v95 = vld [vmem:[%s0 + $0x218] sm:$0xff]
    %v96 = vld [vmem:[%s0 + $0x220] sm:$0xff]
    %v97 = vld [vmem:[%s0 + $0x228] sm:$0xff]
    %v98 = vld [vmem:[%s0 + $0x230] sm:$0xff]
    %v99 = vld [vmem:[%s0 + $0x238] sm:$0xff]
    %v100 = vld [vmem:[%s0 + $0x240] sm:$0xff]
    %v101 = vld [vmem:[%s0 + $0x248] sm:$0xff]
    %v102 = vld [vmem:[%s0 + $0x250] sm:$0xff]
    %v103 = vld [vmem:[%s0 + $0x258] sm:$0xff]
    %v104 = vld [vmem:[%s0 + $0x260] sm:$0xff]
    %v105 = vld [vmem:[%s0 + $0x268] sm:$0xff]
    %v106 = vld [vmem:[%s0 + $0x270] sm:$0xff]
    %v107 = vld [vmem:[%s0 + $0x278] sm:$0xff]
    %v108 = vld [vmem:[%s0 + $0x280] sm:$0xff]
    %v109 = vld [vmem:[%s0 + $0x288] sm:$0xff]
    %v110 = vld [vmem:[%s0 + $0x290] sm:$0xff]
    %v111 = vld [vmem:[%s0 + $0x298] sm:$0xff]
    %v112 = vld [vmem:[%s0 + $0x2a0] sm:$0xff]
    %v113 = vld [vmem:[%s0 + $0x2a8] sm:$0xff]
    %v114 = vld [vmem:[%s0 + $0x2b0] sm:$0xff]
    %v115 = vld [vmem:[%s0 + $0x2b8] sm:$0xff]
    %v116 = vld [vmem:[%s0 + $0x2c0] sm:$0xff]
    %v117 = vld [vmem:[%s0 + $0x2c8] sm:$0xff]
    %v118 = vld [vmem:[%s0 + $0x2d0] sm:$0xff]
    %v119 = vld [vmem:[%s0 + $0x2d8] sm:$0xff]
    %v120 = vld [vmem:[%s0 + $0x2e0] sm:$0xff]
    %v121 = vld [vmem:[%s0 + $0x2e8] sm:$0xff]
    %v122 = vld [vmem:[%s0 + $0x2f0] sm:$0xff]
    %v123 = vld [vmem:[%s0 + $0x2f8] sm:$0xff]
    %v124 = vld [vmem:[%s0 + $0x300] sm:$0xff]
    %v125 = vld [vmem:[%s0 + $0x308] sm:$0xff]
    %v126 = vld [vmem:[%s0 + $0x310] sm:$0xff]
    %v127 = vld [vmem:[%s0 + $0x318] sm:$0xff]
    %v128 = vld [vmem:[%s0 + $0x320] sm:$0xff]
    %v129 = vld [vmem:[%s0 + $0x328] sm:$0xff]
    %v130 = vld [vmem:[%s0 + $0x330] sm:$0xff]
    %v131 = vld [vmem:[%s0 + $0x338] sm:$0xff]
    %v132 = vld [vmem:[%s0 + $0x340] sm:$0xff]
    %v133 = vld [vmem:[%s0 + $0x348] sm:$0xff]
    %v134 = vld [vmem:[%s0 + $0x350] sm:$0xff]
    %v135 = vld [vmem:[%s0 + $0x358] sm:$0xff]
    %v136 = vld [vmem:[%s0 + $0x360] sm:$0xff]
    %v137 = vld [vmem:[%s0 + $0x368] sm:$0xff]
    %v138 = vld [vmem:[%s0 + $0x370] sm:$0xff]
    %v139 = vld [vmem:[%s0 + $0x378] sm:$0xff]
    %v140 = vld [vmem:[%s0 + $0x380] sm:$0xff]
    %v141 = vld [vmem:[%s0 + $0x388] sm:$0xff]
    %v142 = vld [vmem:[%s0 + $0x390] sm:$0xff]
    %v143 = vld [vmem:[%s0 + $0x398] sm:$0xff]
    %v144 = vld [vmem:[%s0 + $0x3a0] sm:$0xff]
    %v145 = vld [vmem:[%s0 + $0x3a8] sm:$0xff]
    %v146 = vld [vmem:[%s0 + $0x3b0] sm:$0xff]
    %v147 = vld [vmem:[%s0 + $0x3b8] sm:$0xff]
    %v148 = vld [vmem:[%s0 + $0x3c0] sm:$0xff]
    %v149 = vld [vmem:[%s0 + $0x3c8] sm:$0xff]
    %v150 = vld [vmem:[%s0 + $0x3d0] sm:$0xff]
    %v151 = vld [vmem:[%s0 + $0x3d8] sm:$0xff]
    %v152 = vld [vmem:[%s0 + $0x3e0] sm:$0xff]
    %v153 = vld [vmem:[%s1] sm:$0xff]
    %v154 = vld [vmem:[%s1 + $0x8] sm:$0xff]
    %v155 = vld [vmem:[%s1 + $0x10] sm:$0xff]
    %v156 = vld [vmem:[%s1 + $0x18] sm:$0xff]
    %v157 = vld [vmem:[%s2] sm:$0xff]
    %v158 = vld [vmem:[%s2 + $0x8] sm:$0xff]
    %v159 = vld [vmem:[%s2 + $0x10] sm:$0xff]
    %v160 = vld [vmem:[%s2 + $0x18] sm:$0xff]
    %162 = vset.pattern.permute.xlu0 0
    %163 = vperm.xlu0 %162, %v157
    %v164 = vpop.permute.xlu0 %163
    %167 = vset.pattern.permute.xlu0 0
    %168 = vperm.xlu0 %167, %v158
    %v169 = vpop.permute.xlu0 %168
    %172 = vset.pattern.permute.xlu0 0
    %173 = vperm.xlu0 %172, %v159
    %v174 = vpop.permute.xlu0 %173
    %177 = vset.pattern.permute.xlu0 0
    %178 = vperm.xlu0 %177, %v160
    %v179 = vpop.permute.xlu0 %178
    %vm181 = vcmask 31744
    %v183 = vsel %vm181, %v153, 0
    %v186 = vsel %vm181, %v154, 0
    %v189 = vsel %vm181, %v155, 0
    %v192 = vsel %vm181, %v156, 0
    %v195 = vsel %vm181, %v28, 0
    %v198 = vsel %vm181, %v29, 0
    %v201 = vsel %vm181, %v30, 0
    %v204 = vsel %vm181, %v31, 0
    %v207 = vsel %vm181, %v32, 0
    %v210 = vsel %vm181, %v33, 0
    %v213 = vsel %vm181, %v34, 0
    %v216 = vsel %vm181, %v35, 0
    %v219 = vsel %vm181, %v36, 0
    %v222 = vsel %vm181, %v37, 0
    %v225 = vsel %vm181, %v38, 0
    %v228 = vsel %vm181, %v39, 0
    %v231 = vsel %vm181, %v40, 0
    %v234 = vsel %vm181, %v41, 0
    %v237 = vsel %vm181, %v42, 0
    %v240 = vsel %vm181, %v43, 0
    %v243 = vsel %vm181, %v44, 0
    %v246 = vsel %vm181, %v45, 0
    %v249 = vsel %vm181, %v46, 0
    %v252 = vsel %vm181, %v47, 0
    %v255 = vsel %vm181, %v48, 0
    %v258 = vsel %vm181, %v49, 0
    %v261 = vsel %vm181, %v50, 0
    %v264 = vsel %vm181, %v51, 0
    %v267 = vsel %vm181, %v52, 0
    %v270 = vsel %vm181, %v53, 0
    %v273 = vsel %vm181, %v54, 0
    %v276 = vsel %vm181, %v55, 0
    %v279 = vsel %vm181, %v56, 0
    %v282 = vsel %vm181, %v57, 0
    %v285 = vsel %vm181, %v58, 0
    %v288 = vsel %vm181, %v59, 0
    %v291 = vsel %vm181, %v60, 0
    %v294 = vsel %vm181, %v61, 0
    %v297 = vsel %vm181, %v62, 0
    %v300 = vsel %vm181, %v63, 0
    %v303 = vsel %vm181, %v64, 0
    %v306 = vsel %vm181, %v65, 0
    %v309 = vsel %vm181, %v66, 0
    %v312 = vsel %vm181, %v67, 0
    %v315 = vsel %vm181, %v68, 0
    %v318 = vsel %vm181, %v69, 0
    %v321 = vsel %vm181, %v70, 0
    %v324 = vsel %vm181, %v71, 0
    %v327 = vsel %vm181, %v72, 0
    %v330 = vsel %vm181, %v73, 0
    %v333 = vsel %vm181, %v74, 0
    %v336 = vsel %vm181, %v75, 0
    %v339 = vsel %vm181, %v76, 0
    %v342 = vsel %vm181, %v77, 0
    %v345 = vsel %vm181, %v78, 0
    %v348 = vsel %vm181, %v79, 0
    %v351 = vsel %vm181, %v80, 0
    %v354 = vsel %vm181, %v81, 0
    %v357 = vsel %vm181, %v82, 0
    %v360 = vsel %vm181, %v83, 0
    %v363 = vsel %vm181, %v84, 0
    %v366 = vsel %vm181, %v85, 0
    %v369 = vsel %vm181, %v86, 0
    %v372 = vsel %vm181, %v87, 0
    %v375 = vsel %vm181, %v88, 0
    %v378 = vsel %vm181, %v89, 0
    %v381 = vsel %vm181, %v90, 0
    %v384 = vsel %vm181, %v91, 0
    %v387 = vsel %vm181, %v92, 0
    %v390 = vsel %vm181, %v93, 0
    %v393 = vsel %vm181, %v94, 0
    %v396 = vsel %vm181, %v95, 0
    %v399 = vsel %vm181, %v96, 0
    %v402 = vsel %vm181, %v97, 0
    %v405 = vsel %vm181, %v98, 0
    %v408 = vsel %vm181, %v99, 0
    %v411 = vsel %vm181, %v100, 0
    %v414 = vsel %vm181, %v101, 0
    %v417 = vsel %vm181, %v102, 0
    %v420 = vsel %vm181, %v103, 0
    %v423 = vsel %vm181, %v104, 0
    %v426 = vsel %vm181, %v105, 0
    %v429 = vsel %vm181, %v106, 0
    %v432 = vsel %vm181, %v107, 0
    %v435 = vsel %vm181, %v108, 0
    %v438 = vsel %vm181, %v109, 0
    %v441 = vsel %vm181, %v110, 0
    %v444 = vsel %vm181, %v111, 0
    %v447 = vsel %vm181, %v112, 0
    %v450 = vsel %vm181, %v113, 0
    %v453 = vsel %vm181, %v114, 0
    %v456 = vsel %vm181, %v115, 0
    %v459 = vsel %vm181, %v116, 0
    %v462 = vsel %vm181, %v117, 0
    %v465 = vsel %vm181, %v118, 0
    %v468 = vsel %vm181, %v119, 0
    %v471 = vsel %vm181, %v120, 0
    %v474 = vsel %vm181, %v121, 0
    %v477 = vsel %vm181, %v122, 0
    %v480 = vsel %vm181, %v123, 0
    %v483 = vsel %vm181, %v124, 0
    %v486 = vsel %vm181, %v125, 0
    %v489 = vsel %vm181, %v126, 0
    %v492 = vsel %vm181, %v127, 0
    %v495 = vsel %vm181, %v128, 0
    %v498 = vsel %vm181, %v129, 0
    %v501 = vsel %vm181, %v130, 0
    %v504 = vsel %vm181, %v131, 0
    %v507 = vsel %vm181, %v132, 0
    %v510 = vsel %vm181, %v133, 0
    %v513 = vsel %vm181, %v134, 0
    %v516 = vsel %vm181, %v135, 0
    %v519 = vsel %vm181, %v136, 0
    %v522 = vsel %vm181, %v137, 0
    %v525 = vsel %vm181, %v138, 0
    %v528 = vsel %vm181, %v139, 0
    %v531 = vsel %vm181, %v140, 0
    %v534 = vsel %vm181, %v141, 0
    %v537 = vsel %vm181, %v142, 0
    %v540 = vsel %vm181, %v143, 0
    %v543 = vsel %vm181, %v144, 0
    %v546 = vsel %vm181, %v145, 0
    %v549 = vsel %vm181, %v146, 0
    %v552 = vsel %vm181, %v147, 0
    %v555 = vsel %vm181, %v148, 0
    %v558 = vsel %vm181, %v149, 0
    %v561 = vsel %vm181, %v150, 0
    %v564 = vsel %vm181, %v151, 0
    %v567 = vsel %vm181, %v152, 0
    %569 = vmatprep.subr.mxu0 0.0
    %570 = vmatpush1.xpose.msra.mxu0 %v195
    %571 = vmatprep.subr.mxu0 0.0
    %572 = vmatpush1.xpose.msra.mxu0 %v198
    %573 = vmatprep.subr.mxu0 0.0
    %574 = vmatpush1.xpose.msra.mxu0 %v201
    %575 = vmatprep.subr.mxu0 0.0
    %576 = vmatpush1.xpose.msra.mxu0 %v204
    %577 = vmatprep.subr.mxu0 0.0
    %578 = vmatpush1.xpose.msra.mxu0 %v207
    %579 = vmatprep.subr.mxu0 0.0
    %580 = vmatpush1.xpose.msra.mxu0 %v210
    %581 = vmatprep.subr.mxu0 0.0
    %582 = vmatpush1.xpose.msra.mxu0 %v213
    %583 = vmatprep.subr.mxu0 0.0
    %584 = vmatpush1.xpose.msra.mxu0 %v216
    %585 = vmatprep.subr.mxu0 0.0
    %586 = vmatpush1.xpose.msra.mxu0 %v219
    %587 = vmatprep.subr.mxu0 0.0
    %588 = vmatpush1.xpose.msra.mxu0 %v222
    %589 = vmatprep.subr.mxu0 0.0
    %590 = vmatpush1.xpose.msra.mxu0 %v225
    %591 = vmatprep.subr.mxu0 0.0
    %592 = vmatpush1.xpose.msra.mxu0 %v228
    %593 = vmatprep.subr.mxu0 0.0
    %594 = vmatpush1.xpose.msra.mxu0 %v231
    %595 = vmatprep.subr.mxu0 0.0
    %596 = vmatpush1.xpose.msra.mxu0 %v234
    %597 = vmatprep.subr.mxu0 0.0
    %598 = vmatpush1.xpose.msra.mxu0 %v237
    %599 = vmatprep.subr.mxu0 0.0
    %600 = vmatpush1.xpose.msra.mxu0 %v240
    %601 = vmatprep.subr.mxu0 0.0
    %602 = vmatpush1.xpose.msra.mxu0 %v243
    %603 = vmatprep.subr.mxu0 0.0
    %604 = vmatpush1.xpose.msra.mxu0 %v246
    %605 = vmatprep.subr.mxu0 0.0
    %606 = vmatpush1.xpose.msra.mxu0 %v249
    %607 = vmatprep.subr.mxu0 0.0
    %608 = vmatpush1.xpose.msra.mxu0 %v252
    %609 = vmatprep.subr.mxu0 0.0
    %610 = vmatpush1.xpose.msra.mxu0 %v255
    %611 = vmatprep.subr.mxu0 0.0
    %612 = vmatpush1.xpose.msra.mxu0 %v258
    %613 = vmatprep.subr.mxu0 0.0
    %614 = vmatpush1.xpose.msra.mxu0 %v261
    %615 = vmatprep.subr.mxu0 0.0
    %616 = vmatpush1.xpose.msra.mxu0 %v264
    %617 = vmatprep.subr.mxu0 0.0
    %618 = vmatpush1.xpose.msra.mxu0 %v267
    %619 = vmatprep.subr.mxu0 0.0
    %620 = vmatpush1.xpose.msra.mxu0 %v270
    %621 = vmatprep.subr.mxu0 0.0
    %622 = vmatpush1.xpose.msra.mxu0 %v273
    %623 = vmatprep.subr.mxu0 0.0
    %624 = vmatpush1.xpose.msra.mxu0 %v276
    %625 = vmatprep.subr.mxu0 0.0
    %626 = vmatpush1.xpose.msra.mxu0 %v279
    %627 = vmatprep.subr.mxu0 0.0
    %628 = vmatpush1.xpose.msra.mxu0 %v282
    %629 = vmatprep.subr.mxu0 0.0
    %630 = vmatpush1.xpose.msra.mxu0 %v285
    %631 = vmatprep.subr.mxu0 0.0
    %632 = vmatpush1.xpose.msra.mxu0 %v288
    %633 = vmatprep.mubr.f32.mxu0 0.0
    %634 = vmatmul.mubr.f32.gmra.mrb[0].mxu0 %v183
    %v635 = vpop.f32.mrb[0].mxu0
    %v636 = vadd.f32 %v164, %v635
    %v637 = vpop.f32.mrb[0].mxu0
    %v638 = vadd.f32 %v164, %v637
    %639 = vmatprep.mubr.f32.mxu0 0.0
    %640 = vmatmul.mubr.f32.gmra.mrb[0].mxu0 %v186
    %v641 = vpop.f32.mrb[0].mxu0
    %v642 = vadd.f32 %v169, %v641
    %v643 = vpop.f32.mrb[0].mxu0
    %v644 = vadd.f32 %v169, %v643
    %645 = vmatprep.mubr.f32.mxu0 0.0
    %646 = vmatmul.mubr.f32.gmra.mrb[0].mxu0 %v189
    %v647 = vpop.f32.mrb[0].mxu0
    %v648 = vadd.f32 %v174, %v647
    %v649 = vpop.f32.mrb[0].mxu0
    %v650 = vadd.f32 %v174, %v649
    %651 = vmatprep.mubr.f32.mxu0 0.0
    %652 = vmatmul.mubr.f32.gmra.mrb[0].mxu0 %v192
    %v653 = vpop.f32.mrb[0].mxu0
    %v654 = vadd.f32 %v179, %v653
    %v655 = vpop.f32.mrb[0].mxu0
    %v656 = vadd.f32 %v179, %v655
    %657 = vdwg.mxu0
    %658 = vmatprep.subr.mxu0 0.0
    %659 = vmatpush1.xpose.msra.mxu0 %v291
    %660 = vmatprep.subr.mxu0 0.0
    %661 = vmatpush1.xpose.msra.mxu0 %v294
    %662 = vmatprep.subr.mxu0 0.0
    %663 = vmatpush1.xpose.msra.mxu0 %v297
    %664 = vmatprep.subr.mxu0 0.0
    %665 = vmatpush1.xpose.msra.mxu0 %v300
    %666 = vmatprep.subr.mxu0 0.0
    %667 = vmatpush1.xpose.msra.mxu0 %v303
    %668 = vmatprep.subr.mxu0 0.0
    %669 = vmatpush1.xpose.msra.mxu0 %v306
    %670 = vmatprep.subr.mxu0 0.0
    %671 = vmatpush1.xpose.msra.mxu0 %v309
    %672 = vmatprep.subr.mxu0 0.0
    %673 = vmatpush1.xpose.msra.mxu0 %v312
    %674 = vmatprep.subr.mxu0 0.0
    %675 = vmatpush1.xpose.msra.mxu0 %v315
    %676 = vmatprep.subr.mxu0 0.0
    %677 = vmatpush1.xpose.msra.mxu0 %v318
    %678 = vmatprep.subr.mxu0 0.0
    %679 = vmatpush1.xpose.msra.mxu0 %v321
    %680 = vmatprep.subr.mxu0 0.0
    %681 = vmatpush1.xpose.msra.mxu0 %v324
    %682 = vmatprep.subr.mxu0 0.0
    %683 = vmatpush1.xpose.msra.mxu0 %v327
    %684 = vmatprep.subr.mxu0 0.0
    %685 = vmatpush1.xpose.msra.mxu0 %v330
    %686 = vmatprep.subr.mxu0 0.0
    %687 = vmatpush1.xpose.msra.mxu0 %v333
    %688 = vmatprep.subr.mxu0 0.0
    %689 = vmatpush1.xpose.msra.mxu0 %v336
    %690 = vmatprep.subr.mxu0 0.0
    %691 = vmatpush1.xpose.msra.mxu0 %v339
    %692 = vmatprep.subr.mxu0 0.0
    %693 = vmatpush1.xpose.msra.mxu0 %v342
    %694 = vmatprep.subr.mxu0 0.0
    %695 = vmatpush1.xpose.msra.mxu0 %v345
    %696 = vmatprep.subr.mxu0 0.0
    %697 = vmatpush1.xpose.msra.mxu0 %v348
    %698 = vmatprep.subr.mxu0 0.0
    %699 = vmatpush1.xpose.msra.mxu0 %v351
    %700 = vmatprep.subr.mxu0 0.0
    %701 = vmatpush1.xpose.msra.mxu0 %v354
    %702 = vmatprep.subr.mxu0 0.0
    %703 = vmatpush1.xpose.msra.mxu0 %v357
    %704 = vmatprep.subr.mxu0 0.0
    %705 = vmatpush1.xpose.msra.mxu0 %v360
    %706 = vmatprep.subr.mxu0 0.0
    %707 = vmatpush1.xpose.msra.mxu0 %v363
    %708 = vmatprep.subr.mxu0 0.0
    %709 = vmatpush1.xpose.msra.mxu0 %v366
    %710 = vmatprep.subr.mxu0 0.0
    %711 = vmatpush1.xpose.msra.mxu0 %v369
    %712 = vmatprep.subr.mxu0 0.0
    %713 = vmatpush1.xpose.msra.mxu0 %v372
    %714 = vmatprep.subr.mxu0 0.0
    %715 = vmatpush1.xpose.msra.mxu0 %v375
    %716 = vmatprep.subr.mxu0 0.0
    %717 = vmatpush1.xpose.msra.mxu0 %v378
    %718 = vmatprep.subr.mxu0 0.0
    %719 = vmatpush1.xpose.msra.mxu0 %v381
    %720 = vmatprep.subr.mxu0 0.0
    %721 = vmatpush1.xpose.msra.mxu0 %v384
    %722 = vmatprep.mubr.f32.mxu0 0.0
    %723 = vmatmul.mubr.f32.gmra.mrb[0].mxu0 %v183
    %v724 = vpop.f32.mrb[0].mxu0
    %v725 = vadd.f32 %v164, %v724
    %v726 = vpop.f32.mrb[0].mxu0
    %v727 = vadd.f32 %v164, %v726
    %728 = vmatprep.mubr.f32.mxu0 0.0
    %729 = vmatmul.mubr.f32.gmra.mrb[0].mxu0 %v186
    %v730 = vpop.f32.mrb[0].mxu0
    %v731 = vadd.f32 %v169, %v730
    %v732 = vpop.f32.mrb[0].mxu0
    %v733 = vadd.f32 %v169, %v732
    %734 = vmatprep.mubr.f32.mxu0 0.0
    %735 = vmatmul.mubr.f32.gmra.mrb[0].mxu0 %v189
    %v736 = vpop.f32.mrb[0].mxu0
    %v737 = vadd.f32 %v174, %v736
    %v738 = vpop.f32.mrb[0].mxu0
    %v739 = vadd.f32 %v174, %v738
    %740 = vmatprep.mubr.f32.mxu0 0.0
    %741 = vmatmul.mubr.f32.gmra.mrb[0].mxu0 %v192
    %v742 = vpop.f32.mrb[0].mxu0
    %v743 = vadd.f32 %v179, %v742
    %v744 = vpop.f32.mrb[0].mxu0
    %v745 = vadd.f32 %v179, %v744
    %746 = vdwg.mxu0
    %747 = vmatprep.subr.mxu0 0.0
    %748 = vmatpush1.xpose.msra.mxu0 %v387
    %749 = vmatprep.subr.mxu0 0.0
    %750 = vmatpush1.xpose.msra.mxu0 %v390
    %751 = vmatprep.subr.mxu0 0.0
    %752 = vmatpush1.xpose.msra.mxu0 %v393
    %753 = vmatprep.subr.mxu0 0.0
    %754 = vmatpush1.xpose.msra.mxu0 %v396
    %755 = vmatprep.subr.mxu0 0.0
    %756 = vmatpush1.xpose.msra.mxu0 %v399
    %757 = vmatprep.subr.mxu0 0.0
    %758 = vmatpush1.xpose.msra.mxu0 %v402
    %759 = vmatprep.subr.mxu0 0.0
    %760 = vmatpush1.xpose.msra.mxu0 %v405
    %761 = vmatprep.subr.mxu0 0.0
    %762 = vmatpush1.xpose.msra.mxu0 %v408
    %763 = vmatprep.subr.mxu0 0.0
    %764 = vmatpush1.xpose.msra.mxu0 %v411
    %765 = vmatprep.subr.mxu0 0.0
    %766 = vmatpush1.xpose.msra.mxu0 %v414
    %767 = vmatprep.subr.mxu0 0.0
    %768 = vmatpush1.xpose.msra.mxu0 %v417
    %769 = vmatprep.subr.mxu0 0.0
    %770 = vmatpush1.xpose.msra.mxu0 %v420
    %771 = vmatprep.subr.mxu0 0.0
    %772 = vmatpush1.xpose.msra.mxu0 %v423
    %773 = vmatprep.subr.mxu0 0.0
    %774 = vmatpush1.xpose.msra.mxu0 %v426
    %775 = vmatprep.subr.mxu0 0.0
    %776 = vmatpush1.xpose.msra.mxu0 %v429
    %777 = vmatprep.subr.mxu0 0.0
    %778 = vmatpush1.xpose.msra.mxu0 %v432
    %779 = vmatprep.subr.mxu0 0.0
    %780 = vmatpush1.xpose.msra.mxu0 %v435
    %781 = vmatprep.subr.mxu0 0.0
    %782 = vmatpush1.xpose.msra.mxu0 %v438
    %783 = vmatprep.subr.mxu0 0.0
    %784 = vmatpush1.xpose.msra.mxu0 %v441
    %785 = vmatprep.subr.mxu0 0.0
    %786 = vmatpush1.xpose.msra.mxu0 %v444
    %787 = vmatprep.subr.mxu0 0.0
    %788 = vmatpush1.xpose.msra.mxu0 %v447
    %789 = vmatprep.subr.mxu0 0.0
    %790 = vmatpush1.xpose.msra.mxu0 %v450
    %791 = vmatprep.subr.mxu0 0.0
    %792 = vmatpush1.xpose.msra.mxu0 %v453
    %793 = vmatprep.subr.mxu0 0.0
    %794 = vmatpush1.xpose.msra.mxu0 %v456
    %795 = vmatprep.subr.mxu0 0.0
    %796 = vmatpush1.xpose.msra.mxu0 %v459
    %797 = vmatprep.subr.mxu0 0.0
    %798 = vmatpush1.xpose.msra.mxu0 %v462
    %799 = vmatprep.subr.mxu0 0.0
    %800 = vmatpush1.xpose.msra.mxu0 %v465
    %801 = vmatprep.subr.mxu0 0.0
    %802 = vmatpush1.xpose.msra.mxu0 %v468
    %803 = vmatprep.subr.mxu0 0.0
    %804 = vmatpush1.xpose.msra.mxu0 %v471
    %805 = vmatprep.subr.mxu0 0.0
    %806 = vmatpush1.xpose.msra.mxu0 %v474
    %807 = vmatprep.subr.mxu0 0.0
    %808 = vmatpush1.xpose.msra.mxu0 %v477
    %809 = vmatprep.subr.mxu0 0.0
    %810 = vmatpush1.xpose.msra.mxu0 %v480
    %811 = vmatprep.mubr.f32.mxu0 0.0
    %812 = vmatmul.mubr.f32.gmra.mrb[0].mxu0 %v183
    %v813 = vpop.f32.mrb[0].mxu0
    %v814 = vadd.f32 %v164, %v813
    %v815 = vpop.f32.mrb[0].mxu0
    %v816 = vadd.f32 %v164, %v815
    %817 = vmatprep.mubr.f32.mxu0 0.0
    %818 = vmatmul.mubr.f32.gmra.mrb[0].mxu0 %v186
    %v819 = vpop.f32.mrb[0].mxu0
    %v820 = vadd.f32 %v169, %v819
    %v821 = vpop.f32.mrb[0].mxu0
    %v822 = vadd.f32 %v169, %v821
    %823 = vmatprep.mubr.f32.mxu0 0.0
    %824 = vmatmul.mubr.f32.gmra.mrb[0].mxu0 %v189
    %v825 = vpop.f32.mrb[0].mxu0
    %v826 = vadd.f32 %v174, %v825
    %v827 = vpop.f32.mrb[0].mxu0
    %v828 = vadd.f32 %v174, %v827
    %829 = vmatprep.mubr.f32.mxu0 0.0
    %830 = vmatmul.mubr.f32.gmra.mrb[0].mxu0 %v192
    %v831 = vpop.f32.mrb[0].mxu0
    %v832 = vadd.f32 %v179, %v831
    %v833 = vpop.f32.mrb[0].mxu0
    %v834 = vadd.f32 %v179, %v833
    %835 = vdwg.mxu0
    %836 = vmatprep.subr.mxu0 0.0
    %837 = vmatpush1.xpose.msra.mxu0 %v483
    %838 = vmatprep.subr.mxu0 0.0
    %839 = vmatpush1.xpose.msra.mxu0 %v486
    %840 = vmatprep.subr.mxu0 0.0
    %841 = vmatpush1.xpose.msra.mxu0 %v489
    %842 = vmatprep.subr.mxu0 0.0
    %843 = vmatpush1.xpose.msra.mxu0 %v492
    %844 = vmatprep.subr.mxu0 0.0
    %845 = vmatpush1.xpose.msra.mxu0 %v495
    %846 = vmatprep.subr.mxu0 0.0
    %847 = vmatpush1.xpose.msra.mxu0 %v498
    %848 = vmatprep.subr.mxu0 0.0
    %849 = vmatpush1.xpose.msra.mxu0 %v501
    %850 = vmatprep.subr.mxu0 0.0
    %851 = vmatpush1.xpose.msra.mxu0 %v504
    %852 = vmatprep.subr.mxu0 0.0
    %853 = vmatpush1.xpose.msra.mxu0 %v507
    %854 = vmatprep.subr.mxu0 0.0
    %855 = vmatpush1.xpose.msra.mxu0 %v510
    %856 = vmatprep.subr.mxu0 0.0
    %857 = vmatpush1.xpose.msra.mxu0 %v513
    %858 = vmatprep.subr.mxu0 0.0
    %859 = vmatpush1.xpose.msra.mxu0 %v516
    %860 = vmatprep.subr.mxu0 0.0
    %861 = vmatpush1.xpose.msra.mxu0 %v519
    %862 = vmatprep.subr.mxu0 0.0
    %863 = vmatpush1.xpose.msra.mxu0 %v522
    %864 = vmatprep.subr.mxu0 0.0
    %865 = vmatpush1.xpose.msra.mxu0 %v525
    %866 = vmatprep.subr.mxu0 0.0
    %867 = vmatpush1.xpose.msra.mxu0 %v528
    %868 = vmatprep.subr.mxu0 0.0
    %869 = vmatpush1.xpose.msra.mxu0 %v531
    %870 = vmatprep.subr.mxu0 0.0
    %871 = vmatpush1.xpose.msra.mxu0 %v534
    %872 = vmatprep.subr.mxu0 0.0
    %873 = vmatpush1.xpose.msra.mxu0 %v537
    %874 = vmatprep.subr.mxu0 0.0
    %875 = vmatpush1.xpose.msra.mxu0 %v540
    %876 = vmatprep.subr.mxu0 0.0
    %877 = vmatpush1.xpose.msra.mxu0 %v543
    %878 = vmatprep.subr.mxu0 0.0
    %879 = vmatpush1.xpose.msra.mxu0 %v546
    %880 = vmatprep.subr.mxu0 0.0
    %881 = vmatpush1.xpose.msra.mxu0 %v549
    %882 = vmatprep.subr.mxu0 0.0
    %883 = vmatpush1.xpose.msra.mxu0 %v552
    %884 = vmatprep.subr.mxu0 0.0
    %885 = vmatpush1.xpose.msra.mxu0 %v555
    %886 = vmatprep.subr.mxu0 0.0
    %887 = vmatpush1.xpose.msra.mxu0 %v558
    %888 = vmatprep.subr.mxu0 0.0
    %889 = vmatpush1.xpose.msra.mxu0 %v561
    %890 = vmatprep.subr.mxu0 0.0
    %891 = vmatpush1.xpose.msra.mxu0 %v564
    %892 = vmatprep.subr.mxu0 0.0
    %893 = vmatpush1.xpose.msra.mxu0 %v567
    %894 = vmatprep.subr.mxu0 0.0
    %895 = vmatpush1.xpose.msra.mxu0 0.0
    %896 = vmatprep.subr.mxu0 0.0
    %897 = vmatpush1.xpose.msra.mxu0 0.0
    %898 = vmatprep.subr.mxu0 0.0
    %899 = vmatpush1.xpose.msra.mxu0 0.0
    %900 = vmatprep.mubr.f32.mxu0 0.0
    %901 = vmatmul.mubr.f32.gmra.mrb[0].mxu0 %v183
    %v902 = vpop.f32.mrb[0].mxu0
    %v903 = vadd.f32 %v164, %v902
    %v904 = vpop.f32.mrb[0].mxu0
    %v905 = vadd.f32 %v164, %v904
    %906 = vmatprep.mubr.f32.mxu0 0.0
    %907 = vmatmul.mubr.f32.gmra.mrb[0].mxu0 %v186
    %v908 = vpop.f32.mrb[0].mxu0
    %v909 = vadd.f32 %v169, %v908
    %v910 = vpop.f32.mrb[0].mxu0
    %v911 = vadd.f32 %v169, %v910
    %912 = vmatprep.mubr.f32.mxu0 0.0
    %913 = vmatmul.mubr.f32.gmra.mrb[0].mxu0 %v189
    %v914 = vpop.f32.mrb[0].mxu0
    %v915 = vadd.f32 %v174, %v914
    %v916 = vpop.f32.mrb[0].mxu0
    %v917 = vadd.f32 %v174, %v916
    %918 = vmatprep.mubr.f32.mxu0 0.0
    %919 = vmatmul.mubr.f32.gmra.mrb[0].mxu0 %v192
    %v920 = vpop.f32.mrb[0].mxu0
    %v921 = vadd.f32 %v179, %v920
    %v922 = vpop.f32.mrb[0].mxu0
    %v923 = vadd.f32 %v179, %v922
    %924 = vdwg.mxu0
    %v925 = vtanh.pop %v636
    %v926 = vtanh.pop %v638
    %v927 = vtanh.pop %v725
    %v928 = vtanh.pop %v727
    %v929 = vtanh.pop %v814
    %v930 = vtanh.pop %v816
    %v931 = vtanh.pop %v903
    %v932 = vtanh.pop %v905
    %v933 = vtanh.pop %v642
    %v934 = vtanh.pop %v644
    %v935 = vtanh.pop %v731
    %v936 = vtanh.pop %v733
    %v937 = vtanh.pop %v820
    %v938 = vtanh.pop %v822
    %v939 = vtanh.pop %v909
    %v940 = vtanh.pop %v911
    %v941 = vtanh.pop %v648
    %v942 = vtanh.pop %v650
    %v943 = vtanh.pop %v737
    %v944 = vtanh.pop %v739
    %v945 = vtanh.pop %v826
    %v946 = vtanh.pop %v828
    %v947 = vtanh.pop %v915
    %v948 = vtanh.pop %v917
    %v949 = vtanh.pop %v654
    %v950 = vtanh.pop %v656
    %v951 = vtanh.pop %v743
    %v952 = vtanh.pop %v745
    %v953 = vtanh.pop %v832
    %v954 = vtanh.pop %v834
    %v955 = vtanh.pop %v921
    %v956 = vtanh.pop %v923
    %v957 = vld [vmem:[%s3] sm:$0xff]
    %v958 = vld [vmem:[%s3 + $0x8] sm:$0xff]
    %v959 = vld [vmem:[%s3 + $0x10] sm:$0xff]
    %v960 = vld [vmem:[%s3 + $0x18] sm:$0xff]
    %v961 = vld [vmem:[%s4] sm:$0xff]
    %v962 = vld [vmem:[%s4 + $0x8] sm:$0xff]
    %v963 = vld [vmem:[%s4 + $0x10] sm:$0xff]
    %v964 = vld [vmem:[%s4 + $0x18] sm:$0xff]
    %966 = vset.pattern.permute.xlu0 0
    %967 = vperm.xlu0 %966, %v961
    %v968 = vpop.permute.xlu0 %967
    %971 = vset.pattern.permute.xlu0 0
    %972 = vperm.xlu0 %971, %v962
    %v973 = vpop.permute.xlu0 %972
    %976 = vset.pattern.permute.xlu0 0
    %977 = vperm.xlu0 %976, %v963
    %v978 = vpop.permute.xlu0 %977
    %981 = vset.pattern.permute.xlu0 0
    %982 = vperm.xlu0 %981, %v964
    %v983 = vpop.permute.xlu0 %982
    %vm985 = vcmask 261120
    %v987 = vsel %vm985, %v957, 0
    %v990 = vsel %vm985, %v958, 0
    %v993 = vsel %vm985, %v959, 0
    %v996 = vsel %vm985, %v960, 0
    %998 = vmatprep.subr.mxu0 %v926
    %999 = vmatpush1.msra.mxu0 %v925
    %1000 = vmatprep.subr.mxu0 %v934
    %1001 = vmatpush1.msra.mxu0 %v933
    %1002 = vmatprep.subr.mxu0 %v942
    %1003 = vmatpush1.msra.mxu0 %v941
    %1004 = vmatprep.subr.mxu0 %v950
    %1005 = vmatpush1.msra.mxu0 %v949
    %1006 = vmatprep.subr.mxu0 0.0
    %1007 = vmatpush1.msra.mxu0 0.0
    %1008 = vmatprep.subr.mxu0 0.0
    %1009 = vmatpush1.msra.mxu0 0.0
    %1010 = vmatprep.subr.mxu0 0.0
    %1011 = vmatpush1.msra.mxu0 0.0
    %1012 = vmatprep.subr.mxu0 0.0
    %1013 = vmatpush1.msra.mxu0 0.0
    %1014 = vmatprep.subr.mxu0 0.0
    %1015 = vmatpush1.msra.mxu0 0.0
    %1016 = vmatprep.subr.mxu0 0.0
    %1017 = vmatpush1.msra.mxu0 0.0
    %1018 = vmatprep.subr.mxu0 0.0
    %1019 = vmatpush1.msra.mxu0 0.0
    %1020 = vmatprep.subr.mxu0 0.0
    %1021 = vmatpush1.msra.mxu0 0.0
    %1022 = vmatprep.subr.mxu0 0.0
    %1023 = vmatpush1.msra.mxu0 0.0
    %1024 = vmatprep.subr.mxu0 0.0
    %1025 = vmatpush1.msra.mxu0 0.0
    %1026 = vmatprep.subr.mxu0 0.0
    %1027 = vmatpush1.msra.mxu0 0.0
    %1028 = vmatprep.subr.mxu0 0.0
    %1029 = vmatpush1.msra.mxu0 0.0
    %1030 = vmatprep.subr.mxu0 0.0
    %1031 = vmatpush1.msra.mxu0 0.0
    %1032 = vmatprep.subr.mxu0 0.0
    %1033 = vmatpush1.msra.mxu0 0.0
    %1034 = vmatprep.subr.mxu0 0.0
    %1035 = vmatpush1.msra.mxu0 0.0
    %1036 = vmatprep.subr.mxu0 0.0
    %1037 = vmatpush1.msra.mxu0 0.0
    %1038 = vmatprep.subr.mxu0 0.0
    %1039 = vmatpush1.msra.mxu0 0.0
    %1040 = vmatprep.subr.mxu0 0.0
    %1041 = vmatpush1.msra.mxu0 0.0
    %1042 = vmatprep.subr.mxu0 0.0
    %1043 = vmatpush1.msra.mxu0 0.0
    %1044 = vmatprep.subr.mxu0 0.0
    %1045 = vmatpush1.msra.mxu0 0.0
    %1046 = vmatprep.subr.mxu0 0.0
    %1047 = vmatpush1.msra.mxu0 0.0
    %1048 = vmatprep.subr.mxu0 0.0
    %1049 = vmatpush1.msra.mxu0 0.0
    %1050 = vmatprep.subr.mxu0 0.0
    %1051 = vmatpush1.msra.mxu0 0.0
    %1052 = vmatprep.subr.mxu0 0.0
    %1053 = vmatpush1.msra.mxu0 0.0
    %1054 = vmatprep.subr.mxu0 0.0
    %1055 = vmatpush1.msra.mxu0 0.0
    %1056 = vmatprep.subr.mxu0 0.0
    %1057 = vmatpush1.msra.mxu0 0.0
    %1058 = vmatprep.subr.mxu0 0.0
    %1059 = vmatpush1.msra.mxu0 0.0
    %1060 = vmatprep.subr.mxu0 0.0
    %1061 = vmatpush1.msra.mxu0 0.0
    %1062 = vmatprep.mubr.f32.mxu0 0.0
    %1063 = vmatmul.mubr.f32.gmra.mrb[0].mxu0 %v987
    %v1064 = vpop.f32.mrb[0].mxu0
    %v1065 = vadd.f32 %v968, %v1064
    %v1066 = vpop.f32.mrb[0].mxu0
    %v1067 = vadd.f32 %v968, %v1066
    %1068 = vmatprep.mubr.f32.mxu0 0.0
    %1069 = vmatmul.mubr.f32.gmra.mrb[0].mxu0 %v990
    %v1070 = vpop.f32.mrb[0].mxu0
    %v1071 = vadd.f32 %v973, %v1070
    %v1072 = vpop.f32.mrb[0].mxu0
    %v1073 = vadd.f32 %v973, %v1072
    %1074 = vmatprep.mubr.f32.mxu0 0.0
    %1075 = vmatmul.mubr.f32.gmra.mrb[0].mxu0 %v993
    %v1076 = vpop.f32.mrb[0].mxu0
    %v1077 = vadd.f32 %v978, %v1076
    %v1078 = vpop.f32.mrb[0].mxu0
    %v1079 = vadd.f32 %v978, %v1078
    %1080 = vmatprep.mubr.f32.mxu0 0.0
    %1081 = vmatmul.mubr.f32.gmra.mrb[0].mxu0 %v996
    %v1082 = vpop.f32.mrb[0].mxu0
    %v1083 = vadd.f32 %v983, %v1082
    %v1084 = vpop.f32.mrb[0].mxu0
    %v1085 = vadd.f32 %v983, %v1084
    %1086 = vdwg.mxu0
    %1087 = vmatprep.subr.mxu0 %v928
    %1088 = vmatpush1.msra.mxu0 %v927
    %1089 = vmatprep.subr.mxu0 %v936
    %1090 = vmatpush1.msra.mxu0 %v935
    %1091 = vmatprep.subr.mxu0 %v944
    %1092 = vmatpush1.msra.mxu0 %v943
    %1093 = vmatprep.subr.mxu0 %v952
    %1094 = vmatpush1.msra.mxu0 %v951
    %1095 = vmatprep.subr.mxu0 0.0
    %1096 = vmatpush1.msra.mxu0 0.0
    %1097 = vmatprep.subr.mxu0 0.0
    %1098 = vmatpush1.msra.mxu0 0.0
    %1099 = vmatprep.subr.mxu0 0.0
    %1100 = vmatpush1.msra.mxu0 0.0
    %1101 = vmatprep.subr.mxu0 0.0
    %1102 = vmatpush1.msra.mxu0 0.0
    %1103 = vmatprep.subr.mxu0 0.0
    %1104 = vmatpush1.msra.mxu0 0.0
    %1105 = vmatprep.subr.mxu0 0.0
    %1106 = vmatpush1.msra.mxu0 0.0
    %1107 = vmatprep.subr.mxu0 0.0
    %1108 = vmatpush1.msra.mxu0 0.0
    %1109 = vmatprep.subr.mxu0 0.0
    %1110 = vmatpush1.msra.mxu0 0.0
    %1111 = vmatprep.subr.mxu0 0.0
    %1112 = vmatpush1.msra.mxu0 0.0
    %1113 = vmatprep.subr.mxu0 0.0
    %1114 = vmatpush1.msra.mxu0 0.0
    %1115 = vmatprep.subr.mxu0 0.0
    %1116 = vmatpush1.msra.mxu0 0.0
    %1117 = vmatprep.subr.mxu0 0.0
    %1118 = vmatpush1.msra.mxu0 0.0
    %1119 = vmatprep.subr.mxu0 0.0
    %1120 = vmatpush1.msra.mxu0 0.0
    %1121 = vmatprep.subr.mxu0 0.0
    %1122 = vmatpush1.msra.mxu0 0.0
    %1123 = vmatprep.subr.mxu0 0.0
    %1124 = vmatpush1.msra.mxu0 0.0
    %1125 = vmatprep.subr.mxu0 0.0
    %1126 = vmatpush1.msra.mxu0 0.0
    %1127 = vmatprep.subr.mxu0 0.0
    %1128 = vmatpush1.msra.mxu0 0.0
    %1129 = vmatprep.subr.mxu0 0.0
    %1130 = vmatpush1.msra.mxu0 0.0
    %1131 = vmatprep.subr.mxu0 0.0
    %1132 = vmatpush1.msra.mxu0 0.0
    %1133 = vmatprep.subr.mxu0 0.0
    %1134 = vmatpush1.msra.mxu0 0.0
    %1135 = vmatprep.subr.mxu0 0.0
    %1136 = vmatpush1.msra.mxu0 0.0
    %1137 = vmatprep.subr.mxu0 0.0
    %1138 = vmatpush1.msra.mxu0 0.0
    %1139 = vmatprep.subr.mxu0 0.0
    %1140 = vmatpush1.msra.mxu0 0.0
    %1141 = vmatprep.subr.mxu0 0.0
    %1142 = vmatpush1.msra.mxu0 0.0
    %1143 = vmatprep.subr.mxu0 0.0
    %1144 = vmatpush1.msra.mxu0 0.0
    %1145 = vmatprep.subr.mxu0 0.0
    %1146 = vmatpush1.msra.mxu0 0.0
    %1147 = vmatprep.subr.mxu0 0.0
    %1148 = vmatpush1.msra.mxu0 0.0
    %1149 = vmatprep.subr.mxu0 0.0
    %1150 = vmatpush1.msra.mxu0 0.0
    %1151 = vmatprep.mubr.f32.mxu0 0.0
    %1152 = vmatmul.mubr.f32.gmra.mrb[0].mxu0 %v987
    %v1153 = vpop.f32.mrb[0].mxu0
    %v1154 = vadd.f32 %v968, %v1153
    %v1155 = vpop.f32.mrb[0].mxu0
    %v1156 = vadd.f32 %v968, %v1155
    %1157 = vmatprep.mubr.f32.mxu0 0.0
    %1158 = vmatmul.mubr.f32.gmra.mrb[0].mxu0 %v990
    %v1159 = vpop.f32.mrb[0].mxu0
    %v1160 = vadd.f32 %v973, %v1159
    %v1161 = vpop.f32.mrb[0].mxu0
    %v1162 = vadd.f32 %v973, %v1161
    %1163 = vmatprep.mubr.f32.mxu0 0.0
    %1164 = vmatmul.mubr.f32.gmra.mrb[0].mxu0 %v993
    %v1165 = vpop.f32.mrb[0].mxu0
    %v1166 = vadd.f32 %v978, %v1165
    %v1167 = vpop.f32.mrb[0].mxu0
    %v1168 = vadd.f32 %v978, %v1167
    %1169 = vmatprep.mubr.f32.mxu0 0.0
    %1170 = vmatmul.mubr.f32.gmra.mrb[0].mxu0 %v996
    %v1171 = vpop.f32.mrb[0].mxu0
    %v1172 = vadd.f32 %v983, %v1171
    %v1173 = vpop.f32.mrb[0].mxu0
    %v1174 = vadd.f32 %v983, %v1173
    %1175 = vdwg.mxu0
    %1176 = vmatprep.subr.mxu0 %v930
    %1177 = vmatpush1.msra.mxu0 %v929
    %1178 = vmatprep.subr.mxu0 %v938
    %1179 = vmatpush1.msra.mxu0 %v937
    %1180 = vmatprep.subr.mxu0 %v946
    %1181 = vmatpush1.msra.mxu0 %v945
    %1182 = vmatprep.subr.mxu0 %v954
    %1183 = vmatpush1.msra.mxu0 %v953
    %1184 = vmatprep.subr.mxu0 0.0
    %1185 = vmatpush1.msra.mxu0 0.0
    %1186 = vmatprep.subr.mxu0 0.0
    %1187 = vmatpush1.msra.mxu0 0.0
    %1188 = vmatprep.subr.mxu0 0.0
    %1189 = vmatpush1.msra.mxu0 0.0
    %1190 = vmatprep.subr.mxu0 0.0
    %1191 = vmatpush1.msra.mxu0 0.0
    %1192 = vmatprep.subr.mxu0 0.0
    %1193 = vmatpush1.msra.mxu0 0.0
    %1194 = vmatprep.subr.mxu0 0.0
    %1195 = vmatpush1.msra.mxu0 0.0
    %1196 = vmatprep.subr.mxu0 0.0
    %1197 = vmatpush1.msra.mxu0 0.0
    %1198 = vmatprep.subr.mxu0 0.0
    %1199 = vmatpush1.msra.mxu0 0.0
    %1200 = vmatprep.subr.mxu0 0.0
    %1201 = vmatpush1.msra.mxu0 0.0
    %1202 = vmatprep.subr.mxu0 0.0
    %1203 = vmatpush1.msra.mxu0 0.0
    %1204 = vmatprep.subr.mxu0 0.0
    %1205 = vmatpush1.msra.mxu0 0.0
    %1206 = vmatprep.subr.mxu0 0.0
    %1207 = vmatpush1.msra.mxu0 0.0
    %1208 = vmatprep.subr.mxu0 0.0
    %1209 = vmatpush1.msra.mxu0 0.0
    %1210 = vmatprep.subr.mxu0 0.0
    %1211 = vmatpush1.msra.mxu0 0.0
    %1212 = vmatprep.subr.mxu0 0.0
    %1213 = vmatpush1.msra.mxu0 0.0
    %1214 = vmatprep.subr.mxu0 0.0
    %1215 = vmatpush1.msra.mxu0 0.0
    %1216 = vmatprep.subr.mxu0 0.0
    %1217 = vmatpush1.msra.mxu0 0.0
    %1218 = vmatprep.subr.mxu0 0.0
    %1219 = vmatpush1.msra.mxu0 0.0
    %1220 = vmatprep.subr.mxu0 0.0
    %1221 = vmatpush1.msra.mxu0 0.0
    %1222 = vmatprep.subr.mxu0 0.0
    %1223 = vmatpush1.msra.mxu0 0.0
    %1224 = vmatprep.subr.mxu0 0.0
    %1225 = vmatpush1.msra.mxu0 0.0
    %1226 = vmatprep.subr.mxu0 0.0
    %1227 = vmatpush1.msra.mxu0 0.0
    %1228 = vmatprep.subr.mxu0 0.0
    %1229 = vmatpush1.msra.mxu0 0.0
    %1230 = vmatprep.subr.mxu0 0.0
    %1231 = vmatpush1.msra.mxu0 0.0
    %1232 = vmatprep.subr.mxu0 0.0
    %1233 = vmatpush1.msra.mxu0 0.0
    %1234 = vmatprep.subr.mxu0 0.0
    %1235 = vmatpush1.msra.mxu0 0.0
    %1236 = vmatprep.subr.mxu0 0.0
    %1237 = vmatpush1.msra.mxu0 0.0
    %1238 = vmatprep.subr.mxu0 0.0
    %1239 = vmatpush1.msra.mxu0 0.0
    %1240 = vmatprep.mubr.f32.mxu0 0.0
    %1241 = vmatmul.mubr.f32.gmra.mrb[0].mxu0 %v987
    %v1242 = vpop.f32.mrb[0].mxu0
    %v1243 = vadd.f32 %v968, %v1242
    %v1244 = vpop.f32.mrb[0].mxu0
    %v1245 = vadd.f32 %v968, %v1244
    %1246 = vmatprep.mubr.f32.mxu0 0.0
    %1247 = vmatmul.mubr.f32.gmra.mrb[0].mxu0 %v990
    %v1248 = vpop.f32.mrb[0].mxu0
    %v1249 = vadd.f32 %v973, %v1248
    %v1250 = vpop.f32.mrb[0].mxu0
    %v1251 = vadd.f32 %v973, %v1250
    %1252 = vmatprep.mubr.f32.mxu0 0.0
    %1253 = vmatmul.mubr.f32.gmra.mrb[0].mxu0 %v993
    %v1254 = vpop.f32.mrb[0].mxu0
    %v1255 = vadd.f32 %v978, %v1254
    %v1256 = vpop.f32.mrb[0].mxu0
    %v1257 = vadd.f32 %v978, %v1256
    %1258 = vmatprep.mubr.f32.mxu0 0.0
    %1259 = vmatmul.mubr.f32.gmra.mrb[0].mxu0 %v996
    %v1260 = vpop.f32.mrb[0].mxu0
    %v1261 = vadd.f32 %v983, %v1260
    %v1262 = vpop.f32.mrb[0].mxu0
    %v1263 = vadd.f32 %v983, %v1262
    %1264 = vdwg.mxu0
    %1265 = vmatprep.subr.mxu0 %v932
    %1266 = vmatpush1.msra.mxu0 %v931
    %1267 = vmatprep.subr.mxu0 %v940
    %1268 = vmatpush1.msra.mxu0 %v939
    %1269 = vmatprep.subr.mxu0 %v948
    %1270 = vmatpush1.msra.mxu0 %v947
    %1271 = vmatprep.subr.mxu0 %v956
    %1272 = vmatpush1.msra.mxu0 %v955
    %1273 = vmatprep.subr.mxu0 0.0
    %1274 = vmatpush1.msra.mxu0 0.0
    %1275 = vmatprep.subr.mxu0 0.0
    %1276 = vmatpush1.msra.mxu0 0.0
    %1277 = vmatprep.subr.mxu0 0.0
    %1278 = vmatpush1.msra.mxu0 0.0
    %1279 = vmatprep.subr.mxu0 0.0
    %1280 = vmatpush1.msra.mxu0 0.0
    %1281 = vmatprep.subr.mxu0 0.0
    %1282 = vmatpush1.msra.mxu0 0.0
    %1283 = vmatprep.subr.mxu0 0.0
    %1284 = vmatpush1.msra.mxu0 0.0
    %1285 = vmatprep.subr.mxu0 0.0
    %1286 = vmatpush1.msra.mxu0 0.0
    %1287 = vmatprep.subr.mxu0 0.0
    %1288 = vmatpush1.msra.mxu0 0.0
    %1289 = vmatprep.subr.mxu0 0.0
    %1290 = vmatpush1.msra.mxu0 0.0
    %1291 = vmatprep.subr.mxu0 0.0
    %1292 = vmatpush1.msra.mxu0 0.0
    %1293 = vmatprep.subr.mxu0 0.0
    %1294 = vmatpush1.msra.mxu0 0.0
    %1295 = vmatprep.subr.mxu0 0.0
    %1296 = vmatpush1.msra.mxu0 0.0
    %1297 = vmatprep.subr.mxu0 0.0
    %1298 = vmatpush1.msra.mxu0 0.0
    %1299 = vmatprep.subr.mxu0 0.0
    %1300 = vmatpush1.msra.mxu0 0.0
    %1301 = vmatprep.subr.mxu0 0.0
    %1302 = vmatpush1.msra.mxu0 0.0
    %1303 = vmatprep.subr.mxu0 0.0
    %1304 = vmatpush1.msra.mxu0 0.0
    %1305 = vmatprep.subr.mxu0 0.0
    %1306 = vmatpush1.msra.mxu0 0.0
    %1307 = vmatprep.subr.mxu0 0.0
    %1308 = vmatpush1.msra.mxu0 0.0
    %1309 = vmatprep.subr.mxu0 0.0
    %1310 = vmatpush1.msra.mxu0 0.0
    %1311 = vmatprep.subr.mxu0 0.0
    %1312 = vmatpush1.msra.mxu0 0.0
    %1313 = vmatprep.subr.mxu0 0.0
    %1314 = vmatpush1.msra.mxu0 0.0
    %1315 = vmatprep.subr.mxu0 0.0
    %1316 = vmatpush1.msra.mxu0 0.0
    %1317 = vmatprep.subr.mxu0 0.0
    %1318 = vmatpush1.msra.mxu0 0.0
    %1319 = vmatprep.subr.mxu0 0.0
    %1320 = vmatpush1.msra.mxu0 0.0
    %1321 = vmatprep.subr.mxu0 0.0
    %1322 = vmatpush1.msra.mxu0 0.0
    %1323 = vmatprep.subr.mxu0 0.0
    %1324 = vmatpush1.msra.mxu0 0.0
    %1325 = vmatprep.subr.mxu0 0.0
    %1326 = vmatpush1.msra.mxu0 0.0
    %1327 = vmatprep.subr.mxu0 0.0
    %1328 = vmatpush1.msra.mxu0 0.0
    %1329 = vmatprep.mubr.f32.mxu0 0.0
    %1330 = vmatmul.mubr.f32.gmra.mrb[0].mxu0 %v987
    %v1331 = vpop.f32.mrb[0].mxu0
    %v1332 = vadd.f32 %v968, %v1331
    %v1333 = vpop.f32.mrb[0].mxu0
    %v1334 = vadd.f32 %v968, %v1333
    %1335 = vmatprep.mubr.f32.mxu0 0.0
    %1336 = vmatmul.mubr.f32.gmra.mrb[0].mxu0 %v990
    %v1337 = vpop.f32.mrb[0].mxu0
    %v1338 = vadd.f32 %v973, %v1337
    %v1339 = vpop.f32.mrb[0].mxu0
    %v1340 = vadd.f32 %v973, %v1339
    %1341 = vmatprep.mubr.f32.mxu0 0.0
    %1342 = vmatmul.mubr.f32.gmra.mrb[0].mxu0 %v993
    %v1343 = vpop.f32.mrb[0].mxu0
    %v1344 = vadd.f32 %v978, %v1343
    %v1345 = vpop.f32.mrb[0].mxu0
    %v1346 = vadd.f32 %v978, %v1345
    %1347 = vmatprep.mubr.f32.mxu0 0.0
    %1348 = vmatmul.mubr.f32.gmra.mrb[0].mxu0 %v996
    %v1349 = vpop.f32.mrb[0].mxu0
    %v1350 = vadd.f32 %v983, %v1349
    %v1351 = vpop.f32.mrb[0].mxu0
    %v1352 = vadd.f32 %v983, %v1351
    %1353 = vdwg.mxu0
    %v1354 = vtanh.pop %v1065
    %v1355 = vtanh.pop %v1067
    %v1356 = vtanh.pop %v1154
    %v1357 = vtanh.pop %v1156
    %v1358 = vtanh.pop %v1243
    %v1359 = vtanh.pop %v1245
    %v1360 = vtanh.pop %v1332
    %v1361 = vtanh.pop %v1334
    %v1362 = vtanh.pop %v1071
    %v1363 = vtanh.pop %v1073
    %v1364 = vtanh.pop %v1160
    %v1365 = vtanh.pop %v1162
    %v1366 = vtanh.pop %v1249
    %v1367 = vtanh.pop %v1251
    %v1368 = vtanh.pop %v1338
    %v1369 = vtanh.pop %v1340
    %v1370 = vtanh.pop %v1077
    %v1371 = vtanh.pop %v1079
    %v1372 = vtanh.pop %v1166
    %v1373 = vtanh.pop %v1168
    %v1374 = vtanh.pop %v1255
    %v1375 = vtanh.pop %v1257
    %v1376 = vtanh.pop %v1344
    %v1377 = vtanh.pop %v1346
    %v1378 = vtanh.pop %v1083
    %v1379 = vtanh.pop %v1085
    %v1380 = vtanh.pop %v1172
    %v1381 = vtanh.pop %v1174
    %v1382 = vtanh.pop %v1261
    %v1383 = vtanh.pop %v1263
    %v1384 = vtanh.pop %v1350
    %v1385 = vtanh.pop %v1352
    %v1386 = vld [vmem:[%s5] sm:$0xff]
    %v1387 = vld [vmem:[%s5 + $0x8] sm:$0xff]
    %v1388 = vld [vmem:[%s5 + $0x10] sm:$0xff]
    %v1389 = vld [vmem:[%s5 + $0x18] sm:$0xff]
    %1391 = vset.pattern.permute.xlu0 0
    %1392 = vperm.xlu0 %1391, %v1386
    %v1393 = vpop.permute.xlu0 %1392
    %1396 = vset.pattern.permute.xlu0 0
    %1397 = vperm.xlu0 %1396, %v1387
    %v1398 = vpop.permute.xlu0 %1397
    %1401 = vset.pattern.permute.xlu0 0
    %1402 = vperm.xlu0 %1401, %v1388
    %v1403 = vpop.permute.xlu0 %1402
    %1406 = vset.pattern.permute.xlu0 0
    %1407 = vperm.xlu0 %1406, %v1389
    %v1408 = vpop.permute.xlu0 %1407
    %v1410 = vmul.f32 %v1354, %v1393
    %v1411 = vmul.f32 %v1355, %v1393
    %v1412 = vmul.f32 %v1356, %v1393
    %v1413 = vmul.f32 %v1357, %v1393
    %v1414 = vmul.f32 %v1358, %v1393
    %v1415 = vmul.f32 %v1359, %v1393
    %v1416 = vmul.f32 %v1360, %v1393
    %v1417 = vmul.f32 %v1361, %v1393
    %v1418 = vmul.f32 %v1362, %v1398
    %v1419 = vmul.f32 %v1363, %v1398
    %v1420 = vmul.f32 %v1364, %v1398
    %v1421 = vmul.f32 %v1365, %v1398
    %v1422 = vmul.f32 %v1366, %v1398
    %v1423 = vmul.f32 %v1367, %v1398
    %v1424 = vmul.f32 %v1368, %v1398
    %v1425 = vmul.f32 %v1369, %v1398
    %v1426 = vmul.f32 %v1370, %v1403
    %v1427 = vmul.f32 %v1371, %v1403
    %v1428 = vmul.f32 %v1372, %v1403
    %v1429 = vmul.f32 %v1373, %v1403
    %v1430 = vmul.f32 %v1374, %v1403
    %v1431 = vmul.f32 %v1375, %v1403
    %v1432 = vmul.f32 %v1376, %v1403
    %v1433 = vmul.f32 %v1377, %v1403
    %v1434 = vmul.f32 %v1378, %v1408
    %v1435 = vmul.f32 %v1379, %v1408
    %v1436 = vmul.f32 %v1380, %v1408
    %v1437 = vmul.f32 %v1381, %v1408
    %v1438 = vmul.f32 %v1382, %v1408
    %v1439 = vmul.f32 %v1383, %v1408
    %v1440 = vmul.f32 %v1384, %v1408
    %v1441 = vmul.f32 %v1385, %v1408
    %v1442 = vadd.f32 %v1410, %v1418
    %v1443 = vadd.f32 %v1442, %v1426
    %v1444 = vadd.f32 %v1443, %v1434
    %v1445 = vrot.slane %v1444, 4
    %v1446 = vadd.f32 %v1444, %v1445
    %v1447 = vrot.slane %v1446, 2
    %v1448 = vadd.f32 %v1446, %v1447
    %v1449 = vrot.slane %v1448, 1
    %v1450 = vadd.f32 %v1448, %v1449
    %v1451 = vadd.f32 %v1411, %v1419
    %v1452 = vadd.f32 %v1451, %v1427
    %v1453 = vadd.f32 %v1452, %v1435
    %v1454 = vrot.slane %v1453, 4
    %v1455 = vadd.f32 %v1453, %v1454
    %v1456 = vrot.slane %v1455, 2
    %v1457 = vadd.f32 %v1455, %v1456
    %v1458 = vrot.slane %v1457, 1
    %v1459 = vadd.f32 %v1457, %v1458
    %v1460 = vadd.f32 %v1412, %v1420
    %v1461 = vadd.f32 %v1460, %v1428
    %v1462 = vadd.f32 %v1461, %v1436
    %v1463 = vrot.slane %v1462, 4
    %v1464 = vadd.f32 %v1462, %v1463
    %v1465 = vrot.slane %v1464, 2
    %v1466 = vadd.f32 %v1464, %v1465
    %v1467 = vrot.slane %v1466, 1
    %v1468 = vadd.f32 %v1466, %v1467
    %v1469 = vadd.f32 %v1413, %v1421
    %v1470 = vadd.f32 %v1469, %v1429
    %v1471 = vadd.f32 %v1470, %v1437
    %v1472 = vrot.slane %v1471, 4
    %v1473 = vadd.f32 %v1471, %v1472
    %v1474 = vrot.slane %v1473, 2
    %v1475 = vadd.f32 %v1473, %v1474
    %v1476 = vrot.slane %v1475, 1
    %v1477 = vadd.f32 %v1475, %v1476
    %v1478 = vadd.f32 %v1414, %v1422
    %v1479 = vadd.f32 %v1478, %v1430
    %v1480 = vadd.f32 %v1479, %v1438
    %v1481 = vrot.slane %v1480, 4
    %v1482 = vadd.f32 %v1480, %v1481
    %v1483 = vrot.slane %v1482, 2
    %v1484 = vadd.f32 %v1482, %v1483
    %v1485 = vrot.slane %v1484, 1
    %v1486 = vadd.f32 %v1484, %v1485
    %v1487 = vadd.f32 %v1415, %v1423
    %v1488 = vadd.f32 %v1487, %v1431
    %v1489 = vadd.f32 %v1488, %v1439
    %v1490 = vrot.slane %v1489, 4
    %v1491 = vadd.f32 %v1489, %v1490
    %v1492 = vrot.slane %v1491, 2
    %v1493 = vadd.f32 %v1491, %v1492
    %v1494 = vrot.slane %v1493, 1
    %v1495 = vadd.f32 %v1493, %v1494
    %v1496 = vadd.f32 %v1416, %v1424
    %v1497 = vadd.f32 %v1496, %v1432
    %v1498 = vadd.f32 %v1497, %v1440
    %v1499 = vrot.slane %v1498, 4
    %v1500 = vadd.f32 %v1498, %v1499
    %v1501 = vrot.slane %v1500, 2
    %v1502 = vadd.f32 %v1500, %v1501
    %v1503 = vrot.slane %v1502, 1
    %v1504 = vadd.f32 %v1502, %v1503
    %vm1505 = vcmask 850944
    %v1506 = vsel %vm1505, %v1417, 0.0
    %v1507 = vsel %vm1505, %v1425, 0.0
    %v1508 = vadd.f32 %v1506, %v1507
    %v1509 = vsel %vm1505, %v1433, 0.0
    %v1510 = vadd.f32 %v1508, %v1509
    %v1511 = vsel %vm1505, %v1441, 0.0
    %v1512 = vadd.f32 %v1510, %v1511
    %v1513 = vrot.slane %v1512, 4
    %v1514 = vadd.f32 %v1512, %v1513
    %v1515 = vrot.slane %v1514, 2
    %v1516 = vadd.f32 %v1514, %v1515
    %v1517 = vrot.slane %v1516, 1
    %v1518 = vadd.f32 %v1516, %v1517
    %s1519 = sld [smem:[#allocation2]]
    %v1520 = vstv %s1519
    %v1521 = vadd.f32 %v1450, %v1520
    %v1522 = vadd.f32 %v1459, %v1520
    %v1523 = vadd.f32 %v1468, %v1520
    %v1524 = vadd.f32 %v1477, %v1520
    %v1525 = vadd.f32 %v1486, %v1520
    %v1526 = vadd.f32 %v1495, %v1520
    %v1527 = vadd.f32 %v1504, %v1520
    %v1528 = vadd.f32 %v1518, %v1520
    %v1537 = vcombine.low %v1521, %v1522
    %v1538 = vcombine.low %v1523, %v1524
    %v1539 = vcombine.low %v1525, %v1526
    %v1540 = vcombine.low %v1527, %v1528
    %v1542 = vunpack.c.l.s4 1966171168
    %v1543 = vunpack.c.0.s8 %v1542
    %v1544 = vlaneseq
    %v1545 = vshrl.u32 %v1544, 7
    %v1546 = vsub.s32 %v1543, %v1545
    %v1547 = vrot.slane %v1537, %v1546
    %v1549 = vunpack.c.l.s4 1966171168
    %v1550 = vunpack.c.0.s8 %v1549
    %v1551 = vlaneseq
    %v1552 = vshrl.u32 %v1551, 7
    %v1553 = vsub.s32 %v1550, %v1552
    %v1554 = vrot.slane %v1538, %v1553
    %v1556 = vunpack.c.l.s4 1966171168
    %v1557 = vunpack.c.0.s8 %v1556
    %v1558 = vlaneseq
    %v1559 = vshrl.u32 %v1558, 7
    %v1560 = vsub.s32 %v1557, %v1559
    %v1561 = vrot.slane %v1539, %v1560
    %v1563 = vunpack.c.l.s4 1966171168
    %v1564 = vunpack.c.0.s8 %v1563
    %v1565 = vlaneseq
    %v1566 = vshrl.u32 %v1565, 7
    %v1567 = vsub.s32 %v1564, %v1566
    %v1568 = vrot.slane %v1540, %v1567
    %v1569 = vcombine.low %v1547, %v1554
    %v1570 = vcombine.low %v1561, %v1568
    %v1572 = vunpack.c.l.s4 1966171168
    %v1573 = vunpack.c.0.s8 %v1572
    %v1574 = vlaneseq
    %v1575 = vshrl.u32 %v1574, 7
    %v1576 = vsub.s32 %v1573, %v1575
    %v1577 = vrot.slane %v1569, %v1576
    %v1579 = vunpack.c.l.s4 1966171168
    %v1580 = vunpack.c.0.s8 %v1579
    %v1581 = vlaneseq
    %v1582 = vshrl.u32 %v1581, 7
    %v1583 = vsub.s32 %v1580, %v1582
    %v1584 = vrot.slane %v1570, %v1583
    %v1585 = vcombine.low %v1577, %v1584
    %v1587 = vlaneseq
    %vm1588 = vcmp.ge.s32.totalorder %v1587, 0
    %vm1589 = vcmp.lt.s32.totalorder %v1587, 1000
    %vm1590 = vmand %vm1588, %vm1589
    %1591 = vst.msk [vmem:[#allocation3] sm:$0xff] %vm1590, %v1585
    // Predicated region
    $region30: #{tpu_custom_call.1} parent=1 // pred_check
      _
    $region31: #{tpu_custom_call.1} parent=1 // pred_check_branch
      %1593 = sbr.rel (0) target = $region33
    $region32: #{tpu_custom_call.1} parent=1 // pred_region
      %s1595 = ssub.s32 128, 128
      %1596 = vsyncadd [#allocation4], %s1595
      %s1598 = sshll.u32 [#allocation3], 4
      %s1599 = int_to_ptr.vmem [resolvable:$true] %s1598
      %1601 = dma.vmem_to_hbm [thread:$0]  %s1599, 128, %s7, [#allocation4]
    $region33: #{tpu_custom_call.1} parent=1 // pred_fallthru
      _
    // Predicated region
    $region34: #{tpu_custom_call.1} parent=1 // pred_check
      _
    $region35: #{tpu_custom_call.1} parent=1 // pred_check_branch
      %1603 = sbr.rel (0) target = $region37
    $region36: #{tpu_custom_call.1} parent=1 // pred_region
      %1604 = dma.done [#allocation4], 128
    $region37: #{tpu_custom_call.1} parent=1 // pred_fallthru
      _
    %1605 = vsyncpa [#allocation4], 1

</llo_original>
